<compile_context>
chip_gen: v7x
topology: tpu7x:2x2x1
jax: 0.10.0
libtpu: 0.0.40
codegen_flags: <defaults>
</compile_context>

<pallas_src>
import math
from functools import partial

import jax
import jax.numpy as jnp
from jax.experimental import pallas as pl
from jax.experimental.pallas import tpu as pltpu


def _round_up(x, m):
    return (x + m - 1) // m * m


def _activate(z, beta):
    """Module activation: ReLU when beta == 0 (default), Softplus(beta) otherwise.

    Softplus matches torch.nn.Softplus(beta): (1/beta)*log(1+exp(beta*z)) with the
    threshold=20 linearization (in beta*z units).  `beta` is a static Python float.
    """
    if beta > 0.0:
        bz = beta * z
        return jnp.where(bz > 20.0, z,
                         jnp.log(1.0 + jnp.exp(jnp.minimum(bz, 20.0))) * (1.0 / beta))
    return jnp.maximum(z, 0.0)


# --------------------------------- kernels ----------------------------------


def _resblock_kernel_proj(x_ref, w0_ref, b0_ref, wcat_ref, b1_ref, out_ref, *, beta):
    """size_in != size_out: fc_1 and the shortcut Linear fused into one dot."""
    x = x_ref[...]                                                       # [TM, Ci]
    if beta > 0.0:
        ax = _activate(x.astype(jnp.float32), beta).astype(x.dtype)
    else:
        ax = jnp.maximum(x, 0)
    # net = fc_0(act(x)); f32 accumulate, f32 bias add
    h = jnp.dot(ax, w0_ref[...],
                preferred_element_type=jnp.float32) + b0_ref[...]        # [TM, Ch] f32
    hr = _activate(h, beta).astype(x.dtype)                              # act(net)
    # out = [act(net), x] @ [w1.T ; ws.T] + b1 == fc_1(act(net)) + shortcut(x)
    cat = jnp.concatenate([hr, x], axis=-1)                              # [TM, Ch+Ci]
    out = jnp.dot(cat, wcat_ref[...],
                  preferred_element_type=jnp.float32) + b1_ref[...]      # [TM, Co] f32
    out_ref[...] = out.astype(out_ref.dtype)


def _resblock_kernel_id(x_ref, w0_ref, b0_ref, w1_ref, b1_ref, out_ref, *, beta):
    """size_in == size_out: identity shortcut, no eye() matmul."""
    x = x_ref[...]
    if beta > 0.0:
        ax = _activate(x.astype(jnp.float32), beta).astype(x.dtype)
    else:
        ax = jnp.maximum(x, 0)
    h = jnp.dot(ax, w0_ref[...],
                preferred_element_type=jnp.float32) + b0_ref[...]
    hr = _activate(h, beta).astype(x.dtype)
    dx = jnp.dot(hr, w1_ref[...],
                 preferred_element_type=jnp.float32) + b1_ref[...]
    out_ref[...] = (dx + x.astype(jnp.float32)).astype(out_ref.dtype)


# --------------------------------- wrapper ----------------------------------


def resnet_block_fc(x, w0, b0, w1, b1, ws=None, *, beta=0.0,
                    operand_dtype=jnp.float32, out_dtype=jnp.float32,
                    tile_rows=1024):
    """Fused ResnetBlockFC forward.

    x : [N, size_in]
    w0: [size_h, size_in], b0: [size_h]      (torch nn.Linear layout)
    w1: [size_out, size_h], b1: [size_out]
    ws: [size_out, size_in] or None (identity shortcut when size_in == size_out)
    beta: 0.0 -> ReLU (module default), > 0 -> Softplus(beta).
    """
    N, size_in = x.shape
    size_h = w0.shape[0]
    size_out = w1.shape[0]
    identity = ws is None
    if identity:
        assert size_in == size_out, "identity shortcut requires size_in == size_out"

    f32 = jnp.float32
    # lane-dense padded feature widths (multiples of 128)
    ci = _round_up(size_in, 128)
    ch = _round_up(size_h, 128)
    co = _round_up(size_out, 128)

    op_b = jnp.dtype(operand_dtype).itemsize
    out_b = jnp.dtype(out_dtype).itemsize

    # row tile (multiple of 8), auto-shrunk so streaming + resident fits VMEM
    tm = max(8, _round_up(min(tile_rows, _round_up(N, 8)), 8))
    weights_bytes = (ci * ch + (ch + ci) * co) * op_b + (ch + co) * 4

    def _streamed(t):
        return (2 * t * ci * op_b          # double-buffered x tiles
                + 2 * t * co * out_b       # double-buffered out tiles
                + t * (2 * ch + ci + co) * 4)   # f32 temporaries

    while tm > 256 and weights_bytes + _streamed(tm) > 40 * 1024 * 1024:
        tm = max(8, _round_up(tm // 2, 8))

    n_pad = _round_up(N, tm)
    grid = (n_pad // tm,)

    # padded + transposed ([in, out]) operands; biases stay f32
    xp = jnp.zeros((n_pad, ci), operand_dtype).at[:N, :size_in].set(
        x.astype(operand_dtype))
    w0p = jnp.zeros((ci, ch), operand_dtype).at[:size_in, :size_h].set(
        w0.T.astype(operand_dtype))
    b0p = jnp.zeros((1, ch), f32).at[0, :size_h].set(b0.astype(f32))
    b1p = jnp.zeros((1, co), f32).at[0, :size_out].set(b1.astype(f32))

    if identity:
        w2 = jnp.zeros((ch, co), operand_dtype).at[:size_h, :size_out].set(
            w1.T.astype(operand_dtype))
        kernel = partial(_resblock_kernel_id, beta=float(beta))
    else:
        # stack fc_1 and shortcut weights so one K=(ch+ci) matmul gives dx + x_s
        w2 = jnp.zeros((ch + ci, co), operand_dtype)
        w2 = w2.at[:size_h, :size_out].set(w1.T.astype(operand_dtype))
        w2 = w2.at[ch:ch + size_in, :size_out].set(ws.T.astype(operand_dtype))
        kernel = partial(_resblock_kernel_proj, beta=float(beta))

    resident = lambda a: pl.BlockSpec(a.shape, lambda i: (0, 0))

    vmem_est = weights_bytes + _streamed(tm)
    vmem_limit = int(min(60 * 1024 * 1024, max(32 * 1024 * 1024, 2 * vmem_est)))

    out = pl.pallas_call(
        kernel,
        out_shape=jax.ShapeDtypeStruct((n_pad, co), out_dtype),
        grid=grid,
        in_specs=[pl.BlockSpec((tm, ci), lambda i: (i, 0)),
                  resident(w0p), resident(b0p), resident(w2), resident(b1p)],
        out_specs=pl.BlockSpec((tm, co), lambda i: (i, 0)),
        compiler_params=pltpu.CompilerParams(
            dimension_semantics=("parallel",),
            vmem_limit_bytes=vmem_limit),
    )(xp, w0p, b0p, w2, b1p)

    return out[:N, :size_out]


# ------------------------- init / reference (torch layout) ------------------


def init_params(key, size_in, size_out=None, size_h=None):
    """Deterministic re-implementation of ResnetBlockFC.__init__ param init."""
    if size_out is None:
        size_out = size_in
    if size_h is None:
        size_h = min(size_in, size_out)
    k0, ks = jax.random.split(key)
    std0 = math.sqrt(2.0 / size_in)                  # kaiming_normal_, fan_in, ReLU gain
    w0 = jax.random.normal(k0, (size_h, size_in), jnp.float32) * std0
    b0 = jnp.zeros((size_h,), jnp.float32)
    w1 = jnp.zeros((size_out, size_h), jnp.float32)  # nn.init.zeros_
    b1 = jnp.zeros((size_out,), jnp.float32)
    if size_in == size_out:
        ws = None                                    # identity shortcut
    else:
        ws = (jax.random.normal(ks, (size_out, size_in), jnp.float32)
              * math.sqrt(2.0 / size_in))
    return w0, b0, w1, b1, ws


def reference_forward(x, w0, b0, w1, b1, ws=None, beta=0.0):
    """Pure-JAX reference mirroring the PyTorch forward (torch weight layout)."""
    def act(z):
        if beta > 0.0:
            bz = beta * z
            return jnp.where(bz > 20.0, z,
                             jnp.log(1.0 + jnp.exp(jnp.minimum(bz, 20.0))) / beta)
        return jnp.maximum(z, 0.0)
    net = act(x) @ w0.T + b0
    dx = act(net) @ w1.T + b1
    x_s = x if ws is None else x @ ws.T
    return x_s + dx


# ----------------------------------- test ------------------------------------


if __name__ == "__main__":
    key = jax.random.PRNGKey(0)
    kx, kp, kw1, kb, kx2 = jax.random.split(key, 5)

    # ---- case 1: projection shortcut, faithful PyTorch init, f32 -----------
    N, size_in, size_out = 16, 32, 64
    x = jax.random.normal(kx, (N, size_in), jnp.float32)
    w0, b0, w1, b1, ws = init_params(kp, size_in, size_out)
    out = jax.block_until_ready(resnet_block_fc(x, w0, b0, w1, b1, ws))
    ref = reference_forward(x, w0, b0, w1, b1, ws)
    assert out.shape == (N, size_out)
    assert jnp.allclose(out, ref, atol=1e-5, rtol=1e-5)

    # ---- case 2: projection shortcut, random (nonzero) fc_1 weights --------
    w1r = jax.random.normal(kw1, w1.shape, jnp.float32) * 0.25
    b1r = jax.random.normal(kb, b1.shape, jnp.float32) * 0.1
    out = jax.block_until_ready(resnet_block_fc(x, w0, b0, w1r, b1r, ws))
    ref = reference_forward(x, w0, b0, w1r, b1r, ws)
    assert jnp.allclose(out, ref, atol=1e-4, rtol=1e-4)

    # ---- case 3: identity shortcut (size_in == size_out) -------------------
    N2, c = 24, 64
    x2 = jax.random.normal(kx2, (N2, c), jnp.float32)
    w0i, b0i, w1i, b1i, wsi = init_params(kp, c)
    w1i = jax.random.normal(kw1, w1i.shape, jnp.float32) * 0.2
    out = jax.block_until_ready(resnet_block_fc(x2, w0i, b0i, w1i, b1i, wsi))
    ref = reference_forward(x2, w0i, b0i, w1i, b1i, wsi)
    assert out.shape == (N2, c)
    assert jnp.allclose(out, ref, atol=1e-4, rtol=1e-4)

    # ---- case 4: Softplus activation (beta > 0), projection shortcut -------
    out = jax.block_until_ready(
        resnet_block_fc(x, w0, b0, w1r, b1r, ws, beta=1.0))
    ref = reference_forward(x, w0, b0, w1r, b1r, ws, beta=1.0)
    assert jnp.allclose(out, ref, atol=1e-4, rtol=1e-4)

    # ---- case 5: Softplus activation, identity shortcut --------------------
    out = jax.block_until_ready(
        resnet_block_fc(x2, w0i, b0i, w1i, b1i, wsi, beta=2.0))
    ref = reference_forward(x2, w0i, b0i, w1i, b1i, wsi, beta=2.0)
    assert jnp.allclose(out, ref, atol=1e-4, rtol=1e-4)

    # ---- case 6: bf16 operands / bf16 output (v6e / v7x fast path) ---------
    out = jax.block_until_ready(
        resnet_block_fc(x, w0, b0, w1r, b1r, ws,
                        operand_dtype=jnp.bfloat16, out_dtype=jnp.bfloat16))
    ref = reference_forward(x, w0, b0, w1r, b1r, ws)
    assert jnp.allclose(out.astype(jnp.float32), ref, atol=1e-1, rtol=1e-1)

    print("KERNEL_OK")
</pallas_src>

<mosaic_0001>
module attributes {stable_mosaic.version = 11 : i64} {
  func.func @_resblock_kernel_proj(%arg0: i32, %arg1: memref<16x128xf32, #tpu.memory_space<vmem>>, %arg2: memref<128x128xf32, #tpu.memory_space<vmem>>, %arg3: memref<1x128xf32, #tpu.memory_space<vmem>>, %arg4: memref<256x128xf32, #tpu.memory_space<vmem>>, %arg5: memref<1x128xf32, #tpu.memory_space<vmem>>, %arg6: memref<16x128xf32, #tpu.memory_space<vmem>>) attributes {dimension_semantics = [#tpu.dimension_semantics<parallel>], iteration_bounds = array<i64: 1>, scalar_prefetch = 0 : i64, scratch_operands = 0 : i64, tpu.core_type = #tpu.core_type<tc>, window_params = [{transform_indices = @transform_0, window_bounds = array<i64: 16, 128>}, {pipeline_mode = #tpu.pipeline_mode<synchronous>, transform_indices = @transform_1, window_bounds = array<i64: 128, 128>}, {pipeline_mode = #tpu.pipeline_mode<synchronous>, transform_indices = @transform_2, window_bounds = array<i64: 1, 128>}, {pipeline_mode = #tpu.pipeline_mode<synchronous>, transform_indices = @transform_3, window_bounds = array<i64: 256, 128>}, {pipeline_mode = #tpu.pipeline_mode<synchronous>, transform_indices = @transform_4, window_bounds = array<i64: 1, 128>}, {transform_indices = @transform_5, window_bounds = array<i64: 16, 128>}]} {
    %c0 = arith.constant 0 : index
    %c0_0 = arith.constant 0 : index
    %0 = vector.load %arg1[%c0, %c0_0] : memref<16x128xf32, #tpu.memory_space<vmem>>, vector<16x128xf32>
    %cst = arith.constant 0.000000e+00 : f32
    %1 = vector.broadcast %cst : f32 to vector<16x128xf32>
    %2 = arith.maximumf %0, %1 : vector<16x128xf32>
    %c0_1 = arith.constant 0 : index
    %c0_2 = arith.constant 0 : index
    %3 = vector.load %arg2[%c0_1, %c0_2] : memref<128x128xf32, #tpu.memory_space<vmem>>, vector<128x128xf32>
    %cst_3 = arith.constant dense<0.000000e+00> : vector<16x128xf32>
    %4 = tpu.matmul %2, %3, %cst_3 {dimension_numbers = #tpu.dot_dimension_numbers<[1], [0], [0], [1], [0, 0, 1, 1], [], []>} : vector<16x128xf32>, vector<128x128xf32>, vector<16x128xf32> -> vector<16x128xf32>
    %c0_4 = arith.constant 0 : index
    %c0_5 = arith.constant 0 : index
    %5 = vector.load %arg3[%c0_4, %c0_5] : memref<1x128xf32, #tpu.memory_space<vmem>>, vector<1x128xf32>
    %6 = vector.broadcast %5 : vector<1x128xf32> to vector<16x128xf32>
    %7 = arith.addf %4, %6 : vector<16x128xf32>
    %cst_6 = arith.constant 0.000000e+00 : f32
    %8 = vector.broadcast %cst_6 : f32 to vector<16x128xf32>
    %9 = arith.maximumf %7, %8 : vector<16x128xf32>
    %10 = tpu.concatenate %9, %0 in 1 : vector<16x128xf32>, vector<16x128xf32> -> vector<16x256xf32>
    %c0_7 = arith.constant 0 : index
    %c0_8 = arith.constant 0 : index
    %11 = vector.load %arg4[%c0_7, %c0_8] : memref<256x128xf32, #tpu.memory_space<vmem>>, vector<256x128xf32>
    %cst_9 = arith.constant dense<0.000000e+00> : vector<16x128xf32>
    %12 = tpu.matmul %10, %11, %cst_9 {dimension_numbers = #tpu.dot_dimension_numbers<[1], [0], [0], [1], [0, 0, 1, 1], [], []>} : vector<16x256xf32>, vector<256x128xf32>, vector<16x128xf32> -> vector<16x128xf32>
    %c0_10 = arith.constant 0 : index
    %c0_11 = arith.constant 0 : index
    %13 = vector.load %arg5[%c0_10, %c0_11] : memref<1x128xf32, #tpu.memory_space<vmem>>, vector<1x128xf32>
    %14 = vector.broadcast %13 : vector<1x128xf32> to vector<16x128xf32>
    %15 = arith.addf %12, %14 : vector<16x128xf32>
    %c0_12 = arith.constant 0 : index
    %c0_13 = arith.constant 0 : index
    %16 = vector.load %arg6[%c0_12, %c0_13] : memref<16x128xf32, #tpu.memory_space<vmem>>, vector<16x128xf32>
    tpu.vector_store %arg6[%c0_12, %c0_13], %15 {strides = array<i32>} : memref<16x128xf32, #tpu.memory_space<vmem>>, vector<16x128xf32>,
    return
  }
  func.func @transform_0(%arg0: i32) -> (i32, i32) {
    %c0_i32 = arith.constant 0 : i32
    %c0_i32_0 = arith.constant 0 : i32
    return %arg0, %c0_i32 : i32, i32
  }
  func.func @transform_1(%arg0: i32) -> (i32, i32) {
    %c0_i32 = arith.constant 0 : i32
    %c0_i32_0 = arith.constant 0 : i32
    %c0_i32_1 = arith.constant 0 : i32
    return %c0_i32, %c0_i32_0 : i32, i32
  }
  func.func @transform_2(%arg0: i32) -> (i32, i32) {
    %c0_i32 = arith.constant 0 : i32
    %c0_i32_0 = arith.constant 0 : i32
    %c0_i32_1 = arith.constant 0 : i32
    return %c0_i32, %c0_i32_0 : i32, i32
  }
  func.func @transform_3(%arg0: i32) -> (i32, i32) {
    %c0_i32 = arith.constant 0 : i32
    %c0_i32_0 = arith.constant 0 : i32
    %c0_i32_1 = arith.constant 0 : i32
    return %c0_i32, %c0_i32_0 : i32, i32
  }
  func.func @transform_4(%arg0: i32) -> (i32, i32) {
    %c0_i32 = arith.constant 0 : i32
    %c0_i32_0 = arith.constant 0 : i32
    %c0_i32_1 = arith.constant 0 : i32
    return %c0_i32, %c0_i32_0 : i32, i32
  }
  func.func @transform_5(%arg0: i32) -> (i32, i32) {
    %c0_i32 = arith.constant 0 : i32
    %c0_i32_0 = arith.constant 0 : i32
    return %arg0, %c0_i32 : i32, i32
  }
}

</mosaic_0001>

<llo_original>
// kernel: tpu_custom_call.1
$region0: #{tpu_custom_call.1}
  #allocation0 [shape = 'u32[]', space=smem, size = 0x4, offset = 0x4, fixed_abs, tag = 'smem constant byte address 0x4 - core index']
  #allocation1 [shape = 'u32[144,128]{1,0:T(1,128)}', space=vmem, size = 0x12000, scoped, tag = 'internal scratch']
  %s0 = inlined_call_operand.hbm [shape: f32[16,128], index: 0, kind: input, shape index: {}]
  %s1 = inlined_call_operand.hbm [shape: f32[128,128], index: 1, kind: input, shape index: {}]
  %s2 = inlined_call_operand.vmem [shape: f32[1,128], index: 2, kind: input, shape index: {}]
  %s3 = inlined_call_operand.hbm [shape: f32[256,128], index: 3, kind: input, shape index: {}]
  %s4 = inlined_call_operand.vmem [shape: f32[1,128], index: 4, kind: input, shape index: {}]
  %s5 = inlined_call_operand.hbm [shape: f32[16,128], index: 5, kind: output, shape index: {}]
  %s6 = sld [smem:[#allocation0]]
  $region42: #{tpu_custom_call.1} parent=0
    _
  %s8 = ssub.s32 1, %s6
  %s9 = scalar_select 0, %s8, %s6
  $region1: #{tpu_custom_call.1} parent=0
    #allocation2 [shape = 'u8[8192]{0}', space=vmem, size = 0x2000, scoped, tag = 'input window, operand 0, single buffered']
    #allocation3 [shape = 's32[1]{0}', space=sflag, size = 0x4, scoped, tag = 'scoped memory for tpu_custom_call.1']
    #allocation4 [shape = 's32[1]{0}', space=sflag, size = 0x4, scoped, tag = 'scoped memory for tpu_custom_call.1']
    #allocation5 [shape = 'u8[65536]{0}', space=vmem, size = 0x10000, scoped, tag = 'input window, operand 1, single buffered']
    #allocation6 [shape = 's32[1]{0}', space=sflag, size = 0x4, scoped, tag = 'scoped memory for tpu_custom_call.1']
    #allocation7 [shape = 'u8[131072]{0}', space=vmem, size = 0x20000, scoped, tag = 'input window, operand 3, single buffered']
    #allocation8 [shape = 'u8[8192]{0}', space=vmem, size = 0x2000, scoped, tag = 'output window, operand 0, single buffered']
    %10 = vsyncpa [#allocation3], 0
    %11 = vsyncpa [#allocation6], 0
    %12 = vsyncpa [#allocation4], 0
    // Predicated region
    $region2: #{tpu_custom_call.1} parent=1 // pred_check
      _
    $region3: #{tpu_custom_call.1} parent=1 // pred_check_branch
      %14 = sbr.rel (0) target = $region5
    $region4: #{tpu_custom_call.1} parent=1 // pred_region
      %s16 = ssub.s32 256, 256
      %17 = vsyncadd [#allocation3], %s16
      %s18 = sshll.u32 [#allocation2], 4
      %s19 = int_to_ptr.vmem [resolvable:$true] %s18
      %24 = dma.hbm_to_vmem [thread:$0]  %s0, 256, %s19, [#allocation3], 128, 128, 8
    $region5: #{tpu_custom_call.1} parent=1 // pred_fallthru
      _
    // Predicated region
    $region6: #{tpu_custom_call.1} parent=1 // pred_check
      _
    $region7: #{tpu_custom_call.1} parent=1 // pred_check_branch
      %26 = sbr.rel (0) target = $region9
    $region8: #{tpu_custom_call.1} parent=1 // pred_region
      %s28 = ssub.s32 2048, 2048
      %29 = vsyncadd [#allocation6], %s28
      %s30 = sshll.u32 [#allocation5], 4
      %s31 = int_to_ptr.vmem [resolvable:$true] %s30
      %36 = dma.hbm_to_vmem [thread:$0]  %s1, 2048, %s31, [#allocation6], 128, 128, 8
    $region9: #{tpu_custom_call.1} parent=1 // pred_fallthru
      _
    // Predicated region
    $region10: #{tpu_custom_call.1} parent=1 // pred_check
      _
    $region11: #{tpu_custom_call.1} parent=1 // pred_check_branch
      %38 = sbr.rel (0) target = $region13
    $region12: #{tpu_custom_call.1} parent=1 // pred_region
      _
    $region13: #{tpu_custom_call.1} parent=1 // pred_fallthru
      _
    // Predicated region
    $region14: #{tpu_custom_call.1} parent=1 // pred_check
      _
    $region15: #{tpu_custom_call.1} parent=1 // pred_check_branch
      %40 = sbr.rel (0) target = $region17
    $region16: #{tpu_custom_call.1} parent=1 // pred_region
      %s42 = ssub.s32 4096, 4096
      %43 = vsyncadd [#allocation6], %s42
      %s44 = sshll.u32 [#allocation7], 4
      %s45 = int_to_ptr.vmem [resolvable:$true] %s44
      %50 = dma.hbm_to_vmem [thread:$0]  %s3, 4096, %s45, [#allocation6], 128, 128, 8
    $region17: #{tpu_custom_call.1} parent=1 // pred_fallthru
      _
    // Predicated region
    $region18: #{tpu_custom_call.1} parent=1 // pred_check
      _
    $region19: #{tpu_custom_call.1} parent=1 // pred_check_branch
      %52 = sbr.rel (0) target = $region21
    $region20: #{tpu_custom_call.1} parent=1 // pred_region
      _
    $region21: #{tpu_custom_call.1} parent=1 // pred_fallthru
      _
    // Predicated region
    $region22: #{tpu_custom_call.1} parent=1 // pred_check
      _
    $region23: #{tpu_custom_call.1} parent=1 // pred_check_branch
      %54 = sbr.rel (0) target = $region25
    $region24: #{tpu_custom_call.1} parent=1 // pred_region
      %55 = dma.done [#allocation3], 256
    $region25: #{tpu_custom_call.1} parent=1 // pred_fallthru
      _
    // Predicated region
    $region26: #{tpu_custom_call.1} parent=1 // pred_check
      _
    $region27: #{tpu_custom_call.1} parent=1 // pred_check_branch
      %57 = sbr.rel (0) target = $region29
    $region28: #{tpu_custom_call.1} parent=1 // pred_region
      %58 = dma.done [#allocation6], 2048
    $region29: #{tpu_custom_call.1} parent=1 // pred_fallthru
      _
    // Predicated region
    $region30: #{tpu_custom_call.1} parent=1 // pred_check
      _
    $region31: #{tpu_custom_call.1} parent=1 // pred_check_branch
      %60 = sbr.rel (0) target = $region33
    $region32: #{tpu_custom_call.1} parent=1 // pred_region
      %61 = dma.done [#allocation6], 4096
    $region33: #{tpu_custom_call.1} parent=1 // pred_fallthru
      _
    %v62 = vld [vmem:[#allocation2] sm:$0xff]
    %v63 = vld [vmem:[#allocation2 + $0x8] sm:$0xff]
    %v64 = vmax.f32 %v62, 0.0
    %v65 = vmax.f32 %v63, 0.0
    %v66 = vld [vmem:[#allocation5] sm:$0xff]
    %v67 = vld [vmem:[#allocation5 + $0x8] sm:$0xff]
    %v68 = vld [vmem:[#allocation5 + $0x10] sm:$0xff]
    %v69 = vld [vmem:[#allocation5 + $0x18] sm:$0xff]
    %v70 = vld [vmem:[#allocation5 + $0x20] sm:$0xff]
    %v71 = vld [vmem:[#allocation5 + $0x28] sm:$0xff]
    %v72 = vld [vmem:[#allocation5 + $0x30] sm:$0xff]
    %v73 = vld [vmem:[#allocation5 + $0x38] sm:$0xff]
    %v74 = vld [vmem:[#allocation5 + $0x40] sm:$0xff]
    %v75 = vld [vmem:[#allocation5 + $0x48] sm:$0xff]
    %v76 = vld [vmem:[#allocation5 + $0x50] sm:$0xff]
    %v77 = vld [vmem:[#allocation5 + $0x58] sm:$0xff]
    %v78 = vld [vmem:[#allocation5 + $0x60] sm:$0xff]
    %v79 = vld [vmem:[#allocation5 + $0x68] sm:$0xff]
    %v80 = vld [vmem:[#allocation5 + $0x70] sm:$0xff]
    %v81 = vld [vmem:[#allocation5 + $0x78] sm:$0xff]
    %v82 = vld [vmem:[%s2] sm:$0x1]
    %v84 = vlaneseq
    %v85 = vshrl.u32 %v84, 7
    %v86 = vsub.s32 0, %v85
    %v87 = vrot.slane %v82, %v86
    %89 = vmatprep.subr.mxu0 0.0
    %90 = vmatpush1.msra.mxu0 %v66
    %91 = vmatprep.subr.mxu0 0.0
    %92 = vmatpush1.msra.mxu0 %v67
    %93 = vmatprep.subr.mxu0 0.0
    %94 = vmatpush1.msra.mxu0 %v68
    %95 = vmatprep.subr.mxu0 0.0
    %96 = vmatpush1.msra.mxu0 %v69
    %97 = vmatprep.subr.mxu0 0.0
    %98 = vmatpush1.msra.mxu0 %v70
    %99 = vmatprep.subr.mxu0 0.0
    %100 = vmatpush1.msra.mxu0 %v71
    %101 = vmatprep.subr.mxu0 0.0
    %102 = vmatpush1.msra.mxu0 %v72
    %103 = vmatprep.subr.mxu0 0.0
    %104 = vmatpush1.msra.mxu0 %v73
    %105 = vmatprep.subr.mxu0 0.0
    %106 = vmatpush1.msra.mxu0 %v74
    %107 = vmatprep.subr.mxu0 0.0
    %108 = vmatpush1.msra.mxu0 %v75
    %109 = vmatprep.subr.mxu0 0.0
    %110 = vmatpush1.msra.mxu0 %v76
    %111 = vmatprep.subr.mxu0 0.0
    %112 = vmatpush1.msra.mxu0 %v77
    %113 = vmatprep.subr.mxu0 0.0
    %114 = vmatpush1.msra.mxu0 %v78
    %115 = vmatprep.subr.mxu0 0.0
    %116 = vmatpush1.msra.mxu0 %v79
    %117 = vmatprep.subr.mxu0 0.0
    %118 = vmatpush1.msra.mxu0 %v80
    %119 = vmatprep.subr.mxu0 0.0
    %120 = vmatpush1.msra.mxu0 %v81
    %121 = vmatprep.subr.mxu0 0.0
    %122 = vmatpush1.msra.mxu0 0.0
    %123 = vmatprep.subr.mxu0 0.0
    %124 = vmatpush1.msra.mxu0 0.0
    %125 = vmatprep.subr.mxu0 0.0
    %126 = vmatpush1.msra.mxu0 0.0
    %127 = vmatprep.subr.mxu0 0.0
    %128 = vmatpush1.msra.mxu0 0.0
    %129 = vmatprep.subr.mxu0 0.0
    %130 = vmatpush1.msra.mxu0 0.0
    %131 = vmatprep.subr.mxu0 0.0
    %132 = vmatpush1.msra.mxu0 0.0
    %133 = vmatprep.subr.mxu0 0.0
    %134 = vmatpush1.msra.mxu0 0.0
    %135 = vmatprep.subr.mxu0 0.0
    %136 = vmatpush1.msra.mxu0 0.0
    %137 = vmatprep.subr.mxu0 0.0
    %138 = vmatpush1.msra.mxu0 0.0
    %139 = vmatprep.subr.mxu0 0.0
    %140 = vmatpush1.msra.mxu0 0.0
    %141 = vmatprep.subr.mxu0 0.0
    %142 = vmatpush1.msra.mxu0 0.0
    %143 = vmatprep.subr.mxu0 0.0
    %144 = vmatpush1.msra.mxu0 0.0
    %145 = vmatprep.subr.mxu0 0.0
    %146 = vmatpush1.msra.mxu0 0.0
    %147 = vmatprep.subr.mxu0 0.0
    %148 = vmatpush1.msra.mxu0 0.0
    %149 = vmatprep.subr.mxu0 0.0
    %150 = vmatpush1.msra.mxu0 0.0
    %151 = vmatprep.subr.mxu0 0.0
    %152 = vmatpush1.msra.mxu0 0.0
    %153 = vmatprep.mubr.f32.mxu0 0.0
    %154 = vmatmul.mubr.f32.gmra.mrb[0].mxu0 %v64
    %v155 = vpop.f32.mrb[0].mxu0
    %v156 = vadd.f32 %v87, %v155
    %v157 = vpop.f32.mrb[0].mxu0
    %158 = vmatprep.mubr.f32.mxu0 0.0
    %159 = vmatmul.mubr.f32.gmra.mrb[0].mxu0 %v65
    %v160 = vpop.f32.mrb[0].mxu0
    %v161 = vadd.f32 %v87, %v160
    %v162 = vpop.f32.mrb[0].mxu0
    %163 = vdwg.mxu0
    %v164 = vmax.f32 %v156, 0.0
    %v165 = vmax.f32 %v161, 0.0
    %v166 = vld [vmem:[#allocation7] sm:$0xff]
    %v167 = vld [vmem:[#allocation7 + $0x8] sm:$0xff]
    %v168 = vld [vmem:[#allocation7 + $0x10] sm:$0xff]
    %v169 = vld [vmem:[#allocation7 + $0x18] sm:$0xff]
    %v170 = vld [vmem:[#allocation7 + $0x20] sm:$0xff]
    %v171 = vld [vmem:[#allocation7 + $0x28] sm:$0xff]
    %v172 = vld [vmem:[#allocation7 + $0x30] sm:$0xff]
    %v173 = vld [vmem:[#allocation7 + $0x38] sm:$0xff]
    %v174 = vld [vmem:[#allocation7 + $0x40] sm:$0xff]
    %v175 = vld [vmem:[#allocation7 + $0x48] sm:$0xff]
    %v176 = vld [vmem:[#allocation7 + $0x50] sm:$0xff]
    %v177 = vld [vmem:[#allocation7 + $0x58] sm:$0xff]
    %v178 = vld [vmem:[#allocation7 + $0x60] sm:$0xff]
    %v179 = vld [vmem:[#allocation7 + $0x68] sm:$0xff]
    %v180 = vld [vmem:[#allocation7 + $0x70] sm:$0xff]
    %v181 = vld [vmem:[#allocation7 + $0x78] sm:$0xff]
    %v182 = vld [vmem:[#allocation7 + $0x80] sm:$0xff]
    %v183 = vld [vmem:[#allocation7 + $0x88] sm:$0xff]
    %v184 = vld [vmem:[#allocation7 + $0x90] sm:$0xff]
    %v185 = vld [vmem:[#allocation7 + $0x98] sm:$0xff]
    %v186 = vld [vmem:[#allocation7 + $0xa0] sm:$0xff]
    %v187 = vld [vmem:[#allocation7 + $0xa8] sm:$0xff]
    %v188 = vld [vmem:[#allocation7 + $0xb0] sm:$0xff]
    %v189 = vld [vmem:[#allocation7 + $0xb8] sm:$0xff]
    %v190 = vld [vmem:[#allocation7 + $0xc0] sm:$0xff]
    %v191 = vld [vmem:[#allocation7 + $0xc8] sm:$0xff]
    %v192 = vld [vmem:[#allocation7 + $0xd0] sm:$0xff]
    %v193 = vld [vmem:[#allocation7 + $0xd8] sm:$0xff]
    %v194 = vld [vmem:[#allocation7 + $0xe0] sm:$0xff]
    %v195 = vld [vmem:[#allocation7 + $0xe8] sm:$0xff]
    %v196 = vld [vmem:[#allocation7 + $0xf0] sm:$0xff]
    %v197 = vld [vmem:[#allocation7 + $0xf8] sm:$0xff]
    %v198 = vld [vmem:[%s4] sm:$0x1]
    %v200 = vlaneseq
    %v201 = vshrl.u32 %v200, 7
    %v202 = vsub.s32 0, %v201
    %v203 = vrot.slane %v198, %v202
    %205 = vmatprep.subr.mxu0 0.0
    %206 = vmatpush1.msra.mxu0 %v166
    %207 = vmatprep.subr.mxu0 0.0
    %208 = vmatpush1.msra.mxu0 %v167
    %209 = vmatprep.subr.mxu0 0.0
    %210 = vmatpush1.msra.mxu0 %v168
    %211 = vmatprep.subr.mxu0 0.0
    %212 = vmatpush1.msra.mxu0 %v169
    %213 = vmatprep.subr.mxu0 0.0
    %214 = vmatpush1.msra.mxu0 %v170
    %215 = vmatprep.subr.mxu0 0.0
    %216 = vmatpush1.msra.mxu0 %v171
    %217 = vmatprep.subr.mxu0 0.0
    %218 = vmatpush1.msra.mxu0 %v172
    %219 = vmatprep.subr.mxu0 0.0
    %220 = vmatpush1.msra.mxu0 %v173
    %221 = vmatprep.subr.mxu0 0.0
    %222 = vmatpush1.msra.mxu0 %v174
    %223 = vmatprep.subr.mxu0 0.0
    %224 = vmatpush1.msra.mxu0 %v175
    %225 = vmatprep.subr.mxu0 0.0
    %226 = vmatpush1.msra.mxu0 %v176
    %227 = vmatprep.subr.mxu0 0.0
    %228 = vmatpush1.msra.mxu0 %v177
    %229 = vmatprep.subr.mxu0 0.0
    %230 = vmatpush1.msra.mxu0 %v178
    %231 = vmatprep.subr.mxu0 0.0
    %232 = vmatpush1.msra.mxu0 %v179
    %233 = vmatprep.subr.mxu0 0.0
    %234 = vmatpush1.msra.mxu0 %v180
    %235 = vmatprep.subr.mxu0 0.0
    %236 = vmatpush1.msra.mxu0 %v181
    %237 = vmatprep.subr.mxu0 0.0
    %238 = vmatpush1.msra.mxu0 %v182
    %239 = vmatprep.subr.mxu0 0.0
    %240 = vmatpush1.msra.mxu0 %v183
    %241 = vmatprep.subr.mxu0 0.0
    %242 = vmatpush1.msra.mxu0 %v184
    %243 = vmatprep.subr.mxu0 0.0
    %244 = vmatpush1.msra.mxu0 %v185
    %245 = vmatprep.subr.mxu0 0.0
    %246 = vmatpush1.msra.mxu0 %v186
    %247 = vmatprep.subr.mxu0 0.0
    %248 = vmatpush1.msra.mxu0 %v187
    %249 = vmatprep.subr.mxu0 0.0
    %250 = vmatpush1.msra.mxu0 %v188
    %251 = vmatprep.subr.mxu0 0.0
    %252 = vmatpush1.msra.mxu0 %v189
    %253 = vmatprep.subr.mxu0 0.0
    %254 = vmatpush1.msra.mxu0 %v190
    %255 = vmatprep.subr.mxu0 0.0
    %256 = vmatpush1.msra.mxu0 %v191
    %257 = vmatprep.subr.mxu0 0.0
    %258 = vmatpush1.msra.mxu0 %v192
    %259 = vmatprep.subr.mxu0 0.0
    %260 = vmatpush1.msra.mxu0 %v193
    %261 = vmatprep.subr.mxu0 0.0
    %262 = vmatpush1.msra.mxu0 %v194
    %263 = vmatprep.subr.mxu0 0.0
    %264 = vmatpush1.msra.mxu0 %v195
    %265 = vmatprep.subr.mxu0 0.0
    %266 = vmatpush1.msra.mxu0 %v196
    %267 = vmatprep.subr.mxu0 0.0
    %268 = vmatpush1.msra.mxu0 %v197
    %269 = vmatprep.mubr.f32.mxu0 %v62
    %270 = vmatmul.mubr.f32.gmra.mrb[0].mxu0 %v164
    %v271 = vpop.f32.mrb[0].mxu0
    %v272 = vadd.f32 %v203, %v271
    %v273 = vpop.f32.mrb[0].mxu0
    %274 = vmatprep.mubr.f32.mxu0 %v63
    %275 = vmatmul.mubr.f32.gmra.mrb[0].mxu0 %v165
    %v276 = vpop.f32.mrb[0].mxu0
    %v277 = vadd.f32 %v203, %v276
    %v278 = vpop.f32.mrb[0].mxu0
    %279 = vdwg.mxu0
    %280 = vst [vmem:[#allocation8] sm:$0xff] %v272
    %281 = vst [vmem:[#allocation8 + $0x8] sm:$0xff] %v277
    // Predicated region
    $region34: #{tpu_custom_call.1} parent=1 // pred_check
      _
    $region35: #{tpu_custom_call.1} parent=1 // pred_check_branch
      %283 = sbr.rel (0) target = $region37
    $region36: #{tpu_custom_call.1} parent=1 // pred_region
      %s285 = ssub.s32 256, 256
      %286 = vsyncadd [#allocation4], %s285
      %s287 = sshll.u32 [#allocation8], 4
      %s288 = int_to_ptr.vmem [resolvable:$true] %s287
      %293 = dma.vmem_to_hbm [thread:$0]  %s288, 256, %s5, [#allocation4], 128, 128, 8
    $region37: #{tpu_custom_call.1} parent=1 // pred_fallthru
      _
    // Predicated region
    $region38: #{tpu_custom_call.1} parent=1 // pred_check
      _
    $region39: #{tpu_custom_call.1} parent=1 // pred_check_branch
      %295 = sbr.rel (0) target = $region41
    $region40: #{tpu_custom_call.1} parent=1 // pred_region
      %296 = dma.done [#allocation4], 256
    $region41: #{tpu_custom_call.1} parent=1 // pred_fallthru
      _
    %297 = vsyncpa [#allocation3], 1
    %298 = vsyncpa [#allocation6], 1
    %299 = vsyncpa [#allocation4], 1

</llo_original>
